<compile_context>
chip_gen: v7x
topology: tpu7x:2x2x1
jax: 0.10.0
libtpu: 0.0.40
codegen_flags: <defaults>
</compile_context>

<pallas_src>
import numpy as np
import jax
import jax.numpy as jnp
from jax.experimental import pallas as pl
from jax.experimental.pallas import tpu as pltpu


def _round_up(v, m):
    return ((v + m - 1) // m) * m


def _default_conv_act_dtype():
    """bf16 tanh on the large conv intermediates only where the EUP has a
    bf16 path (v6e / v7x); keep f32 on v5e and older chips."""
    try:
        kind = jax.devices()[0].device_kind.lower()
    except Exception:
        return jnp.float32
    if any(tag in kind for tag in ("v6", "v7", "7x")):
        return jnp.bfloat16
    return jnp.float32


# ----------------------------------------------------------------------------
# Pallas kernel: entire Critic forward (bf16 MXU matmuls, f32 accumulation).
# ----------------------------------------------------------------------------
def make_critic_kernel(conv_act_dtype):
    f32 = jnp.float32
    bf16 = jnp.bfloat16

    def mm(a, w_ref):
        # bf16 operands into the MXU, f32 accumulation out.
        return jnp.dot(a.astype(bf16), w_ref[...], preferred_element_type=f32)

    def kernel(x_ref, pars_ref,
               m1_ref, b1_ref,
               m2_ref, b2_ref,
               m3_ref, b3_ref,
               wd_ref, bd_ref,
               wp_ref, bp_ref,
               wc_ref, bc_ref,
               wo_ref,
               o_ref):
        # Conv1 + tanh   (TB, C0*L) @ (C0*L, C1*L1); 208-wide intermediate.
        # tanh dtype is bf16 on v6e/v7x (bf16 EUP), f32 on v5e.
        h = jnp.tanh((mm(x_ref[...], m1_ref) + b1_ref[...]).astype(conv_act_dtype))
        # Conv2 + tanh   (176-wide intermediate).
        h = jnp.tanh((mm(h, m2_ref) + b2_ref[...]).astype(conv_act_dtype))
        # Conv3 + tanh   -> (TB, C3*4)  == x.view(B, -1) in PyTorch.
        h = jnp.tanh(mm(h, m3_ref) + b3_ref[...])
        # dense_layer + tanh
        h = jnp.tanh(mm(h, wd_ref) + bd_ref[...])
        # par_layer + tanh (independent of the conv chain).
        p = jnp.tanh(mm(pars_ref[...], wp_ref) + bp_ref[...])
        # combined_layer + tanh: fused single MXU push on [h | p] (lane concat).
        hp = jnp.concatenate([h, p], axis=-1)                 # (TB, 32) f32
        c = jnp.tanh(mm(hp, wc_ref) + bc_ref[...])            # (TB, 4)  f32
        # out_layer (no bias): tiny K=4 -> VPU multiply + lane reduce.
        val = jnp.sum(c * wo_ref[...], axis=-1, keepdims=True)  # (TB, 1) f32
        # Packed output: DMA writes 4 B/row back to HBM.
        o_ref[...] = val

    return kernel


# ----------------------------------------------------------------------------
# Wrapper: batch-gridded pallas_call with VMEM-resident weights.
# ----------------------------------------------------------------------------
def critic_forward(x, pars, params, *, batch_tile=512, conv_act_dtype=None):
    """x: (B, C0, L) float32, pars: (B, par_dim) float32 -> (B, 1) float32."""
    B, C0, L = x.shape
    bf16 = jnp.bfloat16

    # bf16 activation stream (x dominates HBM traffic).
    x_flat = x.reshape(B, C0 * L).astype(bf16)
    pars_b = pars.astype(bf16)

    if conv_act_dtype is None:
        conv_act_dtype = _default_conv_act_dtype()

    # Batch tiling: multiples of 16 (bf16 sublane packing), large tiles to
    # amortize per-step overhead, and >= 2 grid steps when the batch allows so
    # both v7x TensorCores get work.  Same policy on v5e/v6e.
    B16 = _round_up(max(B, 1), 16)
    tb_cap = _round_up(-(-B16 // 2), 16)          # ceil(B16/2) rounded up to 16
    TB = max(16, min(_round_up(batch_tile, 16), tb_cap))
    B_pad = _round_up(B16, TB)
    if B_pad != B:
        x_flat = jnp.pad(x_flat, ((0, B_pad - B), (0, 0)))
        pars_b = jnp.pad(pars_b, ((0, B_pad - B), (0, 0)))

    weight_keys = ("M1", "b1", "M2", "b2", "M3", "b3",
                   "WdT", "bd", "WpT", "bp", "WcT", "bc", "wo_row")
    weight_args = tuple(params[k] for k in weight_keys)

    def batch_spec(ncols):
        return pl.BlockSpec((TB, ncols), lambda i: (i, 0))

    def const_spec(arr):
        return pl.BlockSpec(tuple(arr.shape), lambda i: (0, 0))

    in_specs = ([batch_spec(x_flat.shape[1]), batch_spec(pars_b.shape[1])]
                + [const_spec(a) for a in weight_args])
    out_spec = pl.BlockSpec((TB, 1), lambda i: (i, 0))

    # Advisory cost estimate (true conv FLOPs, not the zero-inflated fold).
    meta = params["_meta"]
    flops = int(B_pad) * int(meta["flops_per_row"])
    transc = int(B_pad) * int(meta["tanh_per_row"])
    bytes_accessed = (int(x_flat.size) * x_flat.dtype.itemsize
                      + int(pars_b.size) * pars_b.dtype.itemsize
                      + sum(int(a.size) * a.dtype.itemsize for a in weight_args)
                      + int(B_pad) * 4)
    cost = pl.CostEstimate(flops=flops, transcendentals=transc,
                           bytes_accessed=int(bytes_accessed))

    out = pl.pallas_call(
        make_critic_kernel(conv_act_dtype),
        out_shape=jax.ShapeDtypeStruct((B_pad, 1), jnp.float32),
        grid=(B_pad // TB,),
        in_specs=in_specs,
        out_specs=out_spec,
        compiler_params=pltpu.CompilerParams(
            dimension_semantics=("parallel",)),
        cost_estimate=cost,
    )(x_flat, pars_b, *weight_args)
    return out[:B, :]


# ----------------------------------------------------------------------------
# Glue: fold a PyTorch-style Conv1d (OC, IC, K) weight into a flat matmul.
# ----------------------------------------------------------------------------
def conv1d_as_matrix(w, b, L_in, stride):
    """Return M (IC*L_in, OC*L_out), bias_flat (1, OC*L_out) such that
    flatten(conv1d(x, w, b)) == flatten(x) @ M + bias_flat  (channel-major)."""
    w = np.asarray(w, dtype=np.float32)
    b = np.asarray(b, dtype=np.float32)
    OC, IC, K = w.shape
    L_out = (L_in - K) // stride + 1
    M = np.zeros((IC * L_in, OC * L_out), dtype=np.float32)
    for oc in range(OC):
        for t in range(L_out):
            for ic in range(IC):
                for k in range(K):
                    M[ic * L_in + stride * t + k, oc * L_out + t] += w[oc, ic, k]
    bias_flat = np.repeat(b, L_out)[None, :].astype(np.float32)
    return jnp.asarray(M), jnp.asarray(bias_flat), L_out


def prepare_params(raw, L):
    """Fold convs, transpose dense weights, cast matmul operands to bf16."""
    bf16, f32 = jnp.bfloat16, jnp.float32
    M1, b1, L1 = conv1d_as_matrix(raw["conv1_w"], raw["conv1_b"], L, 2)
    M2, b2, L2 = conv1d_as_matrix(raw["conv2_w"], raw["conv2_b"], L1, 2)
    M3, b3, L3 = conv1d_as_matrix(raw["conv3_w"], raw["conv3_b"], L2, 2)

    oc1, ic1, k1 = raw["conv1_w"].shape
    oc2, ic2, k2 = raw["conv2_w"].shape
    oc3, ic3, k3 = raw["conv3_w"].shape
    dense_out, dense_in = raw["dense_w"].shape
    par_out, par_dim = raw["par_w"].shape
    comb_out, comb_in = raw["comb_w"].shape

    flops_per_row = 2 * (oc1 * L1 * ic1 * k1 + oc2 * L2 * ic2 * k2
                         + oc3 * L3 * ic3 * k3 + dense_out * dense_in
                         + par_out * par_dim + comb_out * comb_in + comb_out)
    tanh_per_row = (oc1 * L1 + oc2 * L2 + oc3 * L3
                    + dense_out + par_out + comb_out)

    params = {
        "M1": M1.astype(bf16), "b1": b1,
        "M2": M2.astype(bf16), "b2": b2,
        "M3": M3.astype(bf16), "b3": b3,
        "WdT": jnp.asarray(raw["dense_w"]).T.astype(bf16),
        "bd":  jnp.asarray(raw["dense_b"], f32)[None, :],
        "WpT": jnp.asarray(raw["par_w"]).T.astype(bf16),
        "bp":  jnp.asarray(raw["par_b"], f32)[None, :],
        # fused combined-layer weight for [h | p] @ WcT   (32, 4)
        "WcT": jnp.asarray(raw["comb_w"]).T.astype(bf16),
        "bc":  jnp.asarray(raw["comb_b"], f32)[None, :],
        "wo_row": jnp.asarray(raw["out_w"], f32),          # (1, hidden[0]) f32
        "_meta": {"flops_per_row": int(flops_per_row),
                  "tanh_per_row": int(tanh_per_row)},
    }
    return params, L3


# ----------------------------------------------------------------------------
# Pure-JAX f32 reference (mirrors the PyTorch forward) for correctness check.
# ----------------------------------------------------------------------------
def torch_conv1d_ref(x, w, b, stride):
    out = jax.lax.conv_general_dilated(
        x, w, window_strides=(stride,), padding="VALID",
        dimension_numbers=("NCH", "OIH", "NCH"))
    return out + b[None, :, None]


def critic_ref(x, pars, raw):
    act = jnp.tanh
    h = act(torch_conv1d_ref(x, raw["conv1_w"], raw["conv1_b"], 2))
    h = act(torch_conv1d_ref(h, raw["conv2_w"], raw["conv2_b"], 2))
    h = act(torch_conv1d_ref(h, raw["conv3_w"], raw["conv3_b"], 2))
    h = h.reshape(h.shape[0], -1)
    h = act(h @ raw["dense_w"].T + raw["dense_b"])
    p = act(pars @ raw["par_w"].T + raw["par_b"])
    c = jnp.concatenate([h, p], axis=1)
    c = act(c @ raw["comb_w"].T + raw["comb_b"])
    return c @ raw["out_w"].T


# ----------------------------------------------------------------------------
if __name__ == "__main__":
    # Small shapes consistent with the module: L=54 gives 26 -> 11 -> 4
    # spatial positions, so the flattened conv output is hidden[-1]*4.
    B = 2
    par_dim = 3
    hidden = [4, 8, 16, 16]
    L = 54

    key = jax.random.PRNGKey(0)
    keys = jax.random.split(key, 16)

    def init(k, shape, fan_in):
        return jax.random.normal(k, shape, jnp.float32) / np.sqrt(fan_in)

    raw = {
        "conv1_w": init(keys[0], (hidden[1], hidden[0], 4), hidden[0] * 4),
        "conv1_b": init(keys[1], (hidden[1],), hidden[0] * 4),
        "conv2_w": init(keys[2], (hidden[2], hidden[1], 5), hidden[1] * 5),
        "conv2_b": init(keys[3], (hidden[2],), hidden[1] * 5),
        "conv3_w": init(keys[4], (hidden[3], hidden[2], 5), hidden[2] * 5),
        "conv3_b": init(keys[5], (hidden[3],), hidden[2] * 5),
        "dense_w": init(keys[6], (hidden[3], hidden[3] * 4), hidden[3] * 4),
        "dense_b": init(keys[7], (hidden[3],), hidden[3] * 4),
        "par_w":   init(keys[8], (16, par_dim), par_dim),
        "par_b":   init(keys[9], (16,), par_dim),
        "comb_w":  init(keys[10], (hidden[0], hidden[3] + 16), hidden[3] + 16),
        "comb_b":  init(keys[11], (hidden[0],), hidden[3] + 16),
        "out_w":   init(keys[12], (1, hidden[0]), hidden[0]),
    }

    params, L3 = prepare_params(raw, L)
    assert L3 == 4, f"flattened conv length must be 4, got {L3}"

    # --- test 1: tiny batch (single grid step, padded to 16 rows) -----------
    kx, kp = jax.random.split(keys[13], 2)
    x = jax.random.normal(kx, (B, hidden[0], L), jnp.float32)
    pars = jax.random.normal(kp, (B, par_dim), jnp.float32)

    out = jax.block_until_ready(critic_forward(x, pars, params))
    ref = jax.block_until_ready(critic_ref(x, pars, raw))
    np.testing.assert_allclose(np.asarray(out), np.asarray(ref),
                               rtol=5e-2, atol=5e-2)

    # --- test 2: multi-step batch grid (exercises padding + parallel axis) --
    B2 = 40
    kx2, kp2 = jax.random.split(keys[14], 2)
    x2 = jax.random.normal(kx2, (B2, hidden[0], L), jnp.float32)
    pars2 = jax.random.normal(kp2, (B2, par_dim), jnp.float32)

    out2 = jax.block_until_ready(critic_forward(x2, pars2, params,
                                                batch_tile=16))
    ref2 = jax.block_until_ready(critic_ref(x2, pars2, raw))
    np.testing.assert_allclose(np.asarray(out2), np.asarray(ref2),
                               rtol=5e-2, atol=5e-2)

    print("KERNEL_OK")
</pallas_src>

<mosaic_0001>
module attributes {stable_mosaic.version = 11 : i64} {
  func.func @kernel(%arg0: i32, %arg1: memref<16x216xbf16, #tpu.memory_space<vmem>>, %arg2: memref<16x3xbf16, #tpu.memory_space<vmem>>, %arg3: memref<216x208xbf16, #tpu.memory_space<vmem>>, %arg4: memref<1x208xf32, #tpu.memory_space<vmem>>, %arg5: memref<208x176xbf16, #tpu.memory_space<vmem>>, %arg6: memref<1x176xf32, #tpu.memory_space<vmem>>, %arg7: memref<176x64xbf16, #tpu.memory_space<vmem>>, %arg8: memref<1x64xf32, #tpu.memory_space<vmem>>, %arg9: memref<64x16xbf16, #tpu.memory_space<vmem>>, %arg10: memref<1x16xf32, #tpu.memory_space<vmem>>, %arg11: memref<3x16xbf16, #tpu.memory_space<vmem>>, %arg12: memref<1x16xf32, #tpu.memory_space<vmem>>, %arg13: memref<32x4xbf16, #tpu.memory_space<vmem>>, %arg14: memref<1x4xf32, #tpu.memory_space<vmem>>, %arg15: memref<1x4xf32, #tpu.memory_space<vmem>>, %arg16: memref<16x1xf32, #tpu.memory_space<vmem>>) attributes {dimension_semantics = [#tpu.dimension_semantics<parallel>], iteration_bounds = array<i64: 1>, scalar_prefetch = 0 : i64, scratch_operands = 0 : i64, tpu.core_type = #tpu.core_type<tc>, window_params = [{transform_indices = @transform_0, window_bounds = array<i64: 16, 216>}, {transform_indices = @transform_1, window_bounds = array<i64: 16, 3>}, {pipeline_mode = #tpu.pipeline_mode<synchronous>, transform_indices = @transform_2, window_bounds = array<i64: 216, 208>}, {pipeline_mode = #tpu.pipeline_mode<synchronous>, transform_indices = @transform_3, window_bounds = array<i64: 1, 208>}, {pipeline_mode = #tpu.pipeline_mode<synchronous>, transform_indices = @transform_4, window_bounds = array<i64: 208, 176>}, {pipeline_mode = #tpu.pipeline_mode<synchronous>, transform_indices = @transform_5, window_bounds = array<i64: 1, 176>}, {pipeline_mode = #tpu.pipeline_mode<synchronous>, transform_indices = @transform_6, window_bounds = array<i64: 176, 64>}, {pipeline_mode = #tpu.pipeline_mode<synchronous>, transform_indices = @transform_7, window_bounds = array<i64: 1, 64>}, {pipeline_mode = #tpu.pipeline_mode<synchronous>, transform_indices = @transform_8, window_bounds = array<i64: 64, 16>}, {pipeline_mode = #tpu.pipeline_mode<synchronous>, transform_indices = @transform_9, window_bounds = array<i64: 1, 16>}, {pipeline_mode = #tpu.pipeline_mode<synchronous>, transform_indices = @transform_10, window_bounds = array<i64: 3, 16>}, {pipeline_mode = #tpu.pipeline_mode<synchronous>, transform_indices = @transform_11, window_bounds = array<i64: 1, 16>}, {pipeline_mode = #tpu.pipeline_mode<synchronous>, transform_indices = @transform_12, window_bounds = array<i64: 32, 4>}, {pipeline_mode = #tpu.pipeline_mode<synchronous>, transform_indices = @transform_13, window_bounds = array<i64: 1, 4>}, {pipeline_mode = #tpu.pipeline_mode<synchronous>, transform_indices = @transform_14, window_bounds = array<i64: 1, 4>}, {transform_indices = @transform_15, window_bounds = array<i64: 16, 1>}]} {
    %c0 = arith.constant 0 : index
    %c0_0 = arith.constant 0 : index
    %0 = vector.load %arg1[%c0, %c0_0] : memref<16x216xbf16, #tpu.memory_space<vmem>>, vector<16x216xbf16>
    %c0_1 = arith.constant 0 : index
    %c0_2 = arith.constant 0 : index
    %1 = vector.load %arg3[%c0_1, %c0_2] : memref<216x208xbf16, #tpu.memory_space<vmem>>, vector<216x208xbf16>
    %cst = arith.constant dense<0.000000e+00> : vector<16x208xf32>
    %2 = tpu.matmul %0, %1, %cst {dimension_numbers = #tpu.dot_dimension_numbers<[1], [0], [0], [1], [0, 0, 1, 1], [], []>} : vector<16x216xbf16>, vector<216x208xbf16>, vector<16x208xf32> -> vector<16x208xf32>
    %c0_3 = arith.constant 0 : index
    %c0_4 = arith.constant 0 : index
    %3 = vector.load %arg4[%c0_3, %c0_4] : memref<1x208xf32, #tpu.memory_space<vmem>>, vector<1x208xf32>
    %4 = vector.broadcast %3 : vector<1x208xf32> to vector<16x208xf32>
    %5 = arith.addf %2, %4 : vector<16x208xf32>
    %6 = math.tanh %5 : vector<16x208xf32>
    %7 = arith.truncf %6 : vector<16x208xf32> to vector<16x208xbf16>
    %c0_5 = arith.constant 0 : index
    %c0_6 = arith.constant 0 : index
    %8 = vector.load %arg5[%c0_5, %c0_6] : memref<208x176xbf16, #tpu.memory_space<vmem>>, vector<208x176xbf16>
    %cst_7 = arith.constant dense<0.000000e+00> : vector<16x176xf32>
    %9 = tpu.matmul %7, %8, %cst_7 {dimension_numbers = #tpu.dot_dimension_numbers<[1], [0], [0], [1], [0, 0, 1, 1], [], []>} : vector<16x208xbf16>, vector<208x176xbf16>, vector<16x176xf32> -> vector<16x176xf32>
    %c0_8 = arith.constant 0 : index
    %c0_9 = arith.constant 0 : index
    %10 = vector.load %arg6[%c0_8, %c0_9] : memref<1x176xf32, #tpu.memory_space<vmem>>, vector<1x176xf32>
    %11 = vector.broadcast %10 : vector<1x176xf32> to vector<16x176xf32>
    %12 = arith.addf %9, %11 : vector<16x176xf32>
    %13 = math.tanh %12 : vector<16x176xf32>
    %14 = arith.truncf %13 : vector<16x176xf32> to vector<16x176xbf16>
    %c0_10 = arith.constant 0 : index
    %c0_11 = arith.constant 0 : index
    %15 = vector.load %arg7[%c0_10, %c0_11] : memref<176x64xbf16, #tpu.memory_space<vmem>>, vector<176x64xbf16>
    %cst_12 = arith.constant dense<0.000000e+00> : vector<16x64xf32>
    %16 = tpu.matmul %14, %15, %cst_12 {dimension_numbers = #tpu.dot_dimension_numbers<[1], [0], [0], [1], [0, 0, 1, 1], [], []>} : vector<16x176xbf16>, vector<176x64xbf16>, vector<16x64xf32> -> vector<16x64xf32>
    %c0_13 = arith.constant 0 : index
    %c0_14 = arith.constant 0 : index
    %17 = vector.load %arg8[%c0_13, %c0_14] : memref<1x64xf32, #tpu.memory_space<vmem>>, vector<1x64xf32>
    %18 = vector.broadcast %17 : vector<1x64xf32> to vector<16x64xf32>
    %19 = arith.addf %16, %18 : vector<16x64xf32>
    %20 = math.tanh %19 : vector<16x64xf32>
    %21 = arith.truncf %20 : vector<16x64xf32> to vector<16x64xbf16>
    %c0_15 = arith.constant 0 : index
    %c0_16 = arith.constant 0 : index
    %22 = vector.load %arg9[%c0_15, %c0_16] : memref<64x16xbf16, #tpu.memory_space<vmem>>, vector<64x16xbf16>
    %cst_17 = arith.constant dense<0.000000e+00> : vector<16x16xf32>
    %23 = tpu.matmul %21, %22, %cst_17 {dimension_numbers = #tpu.dot_dimension_numbers<[1], [0], [0], [1], [0, 0, 1, 1], [], []>} : vector<16x64xbf16>, vector<64x16xbf16>, vector<16x16xf32> -> vector<16x16xf32>
    %c0_18 = arith.constant 0 : index
    %c0_19 = arith.constant 0 : index
    %24 = vector.load %arg10[%c0_18, %c0_19] : memref<1x16xf32, #tpu.memory_space<vmem>>, vector<1x16xf32>
    %25 = vector.broadcast %24 : vector<1x16xf32> to vector<16x16xf32>
    %26 = arith.addf %23, %25 : vector<16x16xf32>
    %27 = math.tanh %26 : vector<16x16xf32>
    %c0_20 = arith.constant 0 : index
    %c0_21 = arith.constant 0 : index
    %28 = vector.load %arg2[%c0_20, %c0_21] : memref<16x3xbf16, #tpu.memory_space<vmem>>, vector<16x3xbf16>
    %c0_22 = arith.constant 0 : index
    %c0_23 = arith.constant 0 : index
    %29 = vector.load %arg11[%c0_22, %c0_23] : memref<3x16xbf16, #tpu.memory_space<vmem>>, vector<3x16xbf16>
    %cst_24 = arith.constant dense<0.000000e+00> : vector<16x16xf32>
    %30 = tpu.matmul %28, %29, %cst_24 {dimension_numbers = #tpu.dot_dimension_numbers<[1], [0], [0], [1], [0, 0, 1, 1], [], []>} : vector<16x3xbf16>, vector<3x16xbf16>, vector<16x16xf32> -> vector<16x16xf32>
    %c0_25 = arith.constant 0 : index
    %c0_26 = arith.constant 0 : index
    %31 = vector.load %arg12[%c0_25, %c0_26] : memref<1x16xf32, #tpu.memory_space<vmem>>, vector<1x16xf32>
    %32 = vector.broadcast %31 : vector<1x16xf32> to vector<16x16xf32>
    %33 = arith.addf %30, %32 : vector<16x16xf32>
    %34 = math.tanh %33 : vector<16x16xf32>
    %35 = tpu.concatenate %27, %34 in 1 : vector<16x16xf32>, vector<16x16xf32> -> vector<16x32xf32>
    %36 = arith.truncf %35 : vector<16x32xf32> to vector<16x32xbf16>
    %c0_27 = arith.constant 0 : index
    %c0_28 = arith.constant 0 : index
    %37 = vector.load %arg13[%c0_27, %c0_28] : memref<32x4xbf16, #tpu.memory_space<vmem>>, vector<32x4xbf16>
    %cst_29 = arith.constant dense<0.000000e+00> : vector<16x4xf32>
    %38 = tpu.matmul %36, %37, %cst_29 {dimension_numbers = #tpu.dot_dimension_numbers<[1], [0], [0], [1], [0, 0, 1, 1], [], []>} : vector<16x32xbf16>, vector<32x4xbf16>, vector<16x4xf32> -> vector<16x4xf32>
    %c0_30 = arith.constant 0 : index
    %c0_31 = arith.constant 0 : index
    %39 = vector.load %arg14[%c0_30, %c0_31] : memref<1x4xf32, #tpu.memory_space<vmem>>, vector<1x4xf32>
    %40 = vector.broadcast %39 : vector<1x4xf32> to vector<16x4xf32>
    %41 = arith.addf %38, %40 : vector<16x4xf32>
    %42 = math.tanh %41 : vector<16x4xf32>
    %c0_32 = arith.constant 0 : index
    %c0_33 = arith.constant 0 : index
    %43 = vector.load %arg15[%c0_32, %c0_33] : memref<1x4xf32, #tpu.memory_space<vmem>>, vector<1x4xf32>
    %44 = vector.broadcast %43 : vector<1x4xf32> to vector<16x4xf32>
    %45 = arith.mulf %42, %44 : vector<16x4xf32>
    %cst_34 = arith.constant dense<0.000000e+00> : vector<16xf32>
    %46 = vector.multi_reduction <add>, %45, %cst_34 [1] : vector<16x4xf32> to vector<16xf32>
    %47 = vector.shape_cast %46 : vector<16xf32> to vector<16x1xf32>
    %c0_35 = arith.constant 0 : index
    %c0_36 = arith.constant 0 : index
    %48 = vector.load %arg16[%c0_35, %c0_36] : memref<16x1xf32, #tpu.memory_space<vmem>>, vector<16x1xf32>
    tpu.vector_store %arg16[%c0_35, %c0_36], %47 {strides = array<i32>} : memref<16x1xf32, #tpu.memory_space<vmem>>, vector<16x1xf32>,
    return
  }
  func.func @transform_0(%arg0: i32) -> (i32, i32) {
    %c0_i32 = arith.constant 0 : i32
    %c0_i32_0 = arith.constant 0 : i32
    return %arg0, %c0_i32 : i32, i32
  }
  func.func @transform_1(%arg0: i32) -> (i32, i32) {
    %c0_i32 = arith.constant 0 : i32
    %c0_i32_0 = arith.constant 0 : i32
    return %arg0, %c0_i32 : i32, i32
  }
  func.func @transform_2(%arg0: i32) -> (i32, i32) {
    %c0_i32 = arith.constant 0 : i32
    %c0_i32_0 = arith.constant 0 : i32
    %c0_i32_1 = arith.constant 0 : i32
    return %c0_i32, %c0_i32_0 : i32, i32
  }
  func.func @transform_3(%arg0: i32) -> (i32, i32) {
    %c0_i32 = arith.constant 0 : i32
    %c0_i32_0 = arith.constant 0 : i32
    %c0_i32_1 = arith.constant 0 : i32
    return %c0_i32, %c0_i32_0 : i32, i32
  }
  func.func @transform_4(%arg0: i32) -> (i32, i32) {
    %c0_i32 = arith.constant 0 : i32
    %c0_i32_0 = arith.constant 0 : i32
    %c0_i32_1 = arith.constant 0 : i32
    return %c0_i32, %c0_i32_0 : i32, i32
  }
  func.func @transform_5(%arg0: i32) -> (i32, i32) {
    %c0_i32 = arith.constant 0 : i32
    %c0_i32_0 = arith.constant 0 : i32
    %c0_i32_1 = arith.constant 0 : i32
    return %c0_i32, %c0_i32_0 : i32, i32
  }
  func.func @transform_6(%arg0: i32) -> (i32, i32) {
    %c0_i32 = arith.constant 0 : i32
    %c0_i32_0 = arith.constant 0 : i32
    %c0_i32_1 = arith.constant 0 : i32
    return %c0_i32, %c0_i32_0 : i32, i32
  }
  func.func @transform_7(%arg0: i32) -> (i32, i32) {
    %c0_i32 = arith.constant 0 : i32
    %c0_i32_0 = arith.constant 0 : i32
    %c0_i32_1 = arith.constant 0 : i32
    return %c0_i32, %c0_i32_0 : i32, i32
  }
  func.func @transform_8(%arg0: i32) -> (i32, i32) {
    %c0_i32 = arith.constant 0 : i32
    %c0_i32_0 = arith.constant 0 : i32
    %c0_i32_1 = arith.constant 0 : i32
    return %c0_i32, %c0_i32_0 : i32, i32
  }
  func.func @transform_9(%arg0: i32) -> (i32, i32) {
    %c0_i32 = arith.constant 0 : i32
    %c0_i32_0 = arith.constant 0 : i32
    %c0_i32_1 = arith.constant 0 : i32
    return %c0_i32, %c0_i32_0 : i32, i32
  }
  func.func @transform_10(%arg0: i32) -> (i32, i32) {
    %c0_i32 = arith.constant 0 : i32
    %c0_i32_0 = arith.constant 0 : i32
    %c0_i32_1 = arith.constant 0 : i32
    return %c0_i32, %c0_i32_0 : i32, i32
  }
  func.func @transform_11(%arg0: i32) -> (i32, i32) {
    %c0_i32 = arith.constant 0 : i32
    %c0_i32_0 = arith.constant 0 : i32
    %c0_i32_1 = arith.constant 0 : i32
    return %c0_i32, %c0_i32_0 : i32, i32
  }
  func.func @transform_12(%arg0: i32) -> (i32, i32) {
    %c0_i32 = arith.constant 0 : i32
    %c0_i32_0 = arith.constant 0 : i32
    %c0_i32_1 = arith.constant 0 : i32
    return %c0_i32, %c0_i32_0 : i32, i32
  }
  func.func @transform_13(%arg0: i32) -> (i32, i32) {
    %c0_i32 = arith.constant 0 : i32
    %c0_i32_0 = arith.constant 0 : i32
    %c0_i32_1 = arith.constant 0 : i32
    return %c0_i32, %c0_i32_0 : i32, i32
  }
  func.func @transform_14(%arg0: i32) -> (i32, i32) {
    %c0_i32 = arith.constant 0 : i32
    %c0_i32_0 = arith.constant 0 : i32
    %c0_i32_1 = arith.constant 0 : i32
    return %c0_i32, %c0_i32_0 : i32, i32
  }
  func.func @transform_15(%arg0: i32) -> (i32, i32) {
    %c0_i32 = arith.constant 0 : i32
    %c0_i32_0 = arith.constant 0 : i32
    return %arg0, %c0_i32 : i32, i32
  }
}

</mosaic_0001>

<llo_original>
// kernel: tpu_custom_call.1
$region0: #{tpu_custom_call.1}
  #allocation0 [shape = 'u32[]', space=smem, size = 0x4, offset = 0x4, fixed_abs, tag = 'smem constant byte address 0x4 - core index']
  #allocation1 [shape = 'u32[144,128]{1,0:T(1,128)}', space=vmem, size = 0x12000, scoped, tag = 'internal scratch']
  %s0 = inlined_call_operand.vmem [shape: bf16[16,216], index: 0, kind: input, shape index: {}]
  %s1 = inlined_call_operand.vmem [shape: bf16[16,3], index: 1, kind: input, shape index: {}]
  %s2 = inlined_call_operand.vmem [shape: bf16[216,208], index: 2, kind: input, shape index: {}]
  %s3 = inlined_call_operand.vmem [shape: f32[1,208], index: 3, kind: input, shape index: {}]
  %s4 = inlined_call_operand.vmem [shape: bf16[208,176], index: 4, kind: input, shape index: {}]
  %s5 = inlined_call_operand.vmem [shape: f32[1,176], index: 5, kind: input, shape index: {}]
  %s6 = inlined_call_operand.vmem [shape: bf16[176,64], index: 6, kind: input, shape index: {}]
  %s7 = inlined_call_operand.vmem [shape: f32[1,64], index: 7, kind: input, shape index: {}]
  %s8 = inlined_call_operand.vmem [shape: bf16[64,16], index: 8, kind: input, shape index: {}]
  %s9 = inlined_call_operand.vmem [shape: f32[1,16], index: 9, kind: input, shape index: {}]
  %s10 = inlined_call_operand.vmem [shape: bf16[3,16], index: 10, kind: input, shape index: {}]
  %s11 = inlined_call_operand.vmem [shape: f32[1,16], index: 11, kind: input, shape index: {}]
  %s12 = inlined_call_operand.vmem [shape: bf16[32,4], index: 12, kind: input, shape index: {}]
  %s13 = inlined_call_operand.vmem [shape: f32[1,4], index: 13, kind: input, shape index: {}]
  %s14 = inlined_call_operand.vmem [shape: f32[1,4], index: 14, kind: input, shape index: {}]
  %s15 = inlined_call_operand.vmem [shape: f32[16,1], index: 15, kind: output, shape index: {}]
  %s16 = sld [smem:[#allocation0]]
  $region70: #{tpu_custom_call.1} parent=0
    _
  %s18 = ssub.s32 1, %s16
  %s19 = scalar_select 0, %s18, %s16
  // Predicated region
  $region2: #{tpu_custom_call.1} parent=0 // pred_check
    _
  $region3: #{tpu_custom_call.1} parent=0 // pred_check_branch
    %21 = sbr.rel (0) target = $region5
  $region4: #{tpu_custom_call.1} parent=0 // pred_region
    _
  $region5: #{tpu_custom_call.1} parent=0 // pred_fallthru
    _
  // Predicated region
  $region6: #{tpu_custom_call.1} parent=0 // pred_check
    _
  $region7: #{tpu_custom_call.1} parent=0 // pred_check_branch
    %23 = sbr.rel (0) target = $region9
  $region8: #{tpu_custom_call.1} parent=0 // pred_region
    _
  $region9: #{tpu_custom_call.1} parent=0 // pred_fallthru
    _
  // Predicated region
  $region10: #{tpu_custom_call.1} parent=0 // pred_check
    _
  $region11: #{tpu_custom_call.1} parent=0 // pred_check_branch
    %25 = sbr.rel (0) target = $region13
  $region12: #{tpu_custom_call.1} parent=0 // pred_region
    _
  $region13: #{tpu_custom_call.1} parent=0 // pred_fallthru
    _
  // Predicated region
  $region14: #{tpu_custom_call.1} parent=0 // pred_check
    _
  $region15: #{tpu_custom_call.1} parent=0 // pred_check_branch
    %27 = sbr.rel (0) target = $region17
  $region16: #{tpu_custom_call.1} parent=0 // pred_region
    _
  $region17: #{tpu_custom_call.1} parent=0 // pred_fallthru
    _
  // Predicated region
  $region18: #{tpu_custom_call.1} parent=0 // pred_check
    _
  $region19: #{tpu_custom_call.1} parent=0 // pred_check_branch
    %29 = sbr.rel (0) target = $region21
  $region20: #{tpu_custom_call.1} parent=0 // pred_region
    _
  $region21: #{tpu_custom_call.1} parent=0 // pred_fallthru
    _
  // Predicated region
  $region22: #{tpu_custom_call.1} parent=0 // pred_check
    _
  $region23: #{tpu_custom_call.1} parent=0 // pred_check_branch
    %31 = sbr.rel (0) target = $region25
  $region24: #{tpu_custom_call.1} parent=0 // pred_region
    _
  $region25: #{tpu_custom_call.1} parent=0 // pred_fallthru
    _
  // Predicated region
  $region26: #{tpu_custom_call.1} parent=0 // pred_check
    _
  $region27: #{tpu_custom_call.1} parent=0 // pred_check_branch
    %33 = sbr.rel (0) target = $region29
  $region28: #{tpu_custom_call.1} parent=0 // pred_region
    _
  $region29: #{tpu_custom_call.1} parent=0 // pred_fallthru
    _
  // Predicated region
  $region30: #{tpu_custom_call.1} parent=0 // pred_check
    _
  $region31: #{tpu_custom_call.1} parent=0 // pred_check_branch
    %35 = sbr.rel (0) target = $region33
  $region32: #{tpu_custom_call.1} parent=0 // pred_region
    _
  $region33: #{tpu_custom_call.1} parent=0 // pred_fallthru
    _
  // Predicated region
  $region34: #{tpu_custom_call.1} parent=0 // pred_check
    _
  $region35: #{tpu_custom_call.1} parent=0 // pred_check_branch
    %37 = sbr.rel (0) target = $region37
  $region36: #{tpu_custom_call.1} parent=0 // pred_region
    _
  $region37: #{tpu_custom_call.1} parent=0 // pred_fallthru
    _
  // Predicated region
  $region38: #{tpu_custom_call.1} parent=0 // pred_check
    _
  $region39: #{tpu_custom_call.1} parent=0 // pred_check_branch
    %39 = sbr.rel (0) target = $region41
  $region40: #{tpu_custom_call.1} parent=0 // pred_region
    _
  $region41: #{tpu_custom_call.1} parent=0 // pred_fallthru
    _
  // Predicated region
  $region42: #{tpu_custom_call.1} parent=0 // pred_check
    _
  $region43: #{tpu_custom_call.1} parent=0 // pred_check_branch
    %41 = sbr.rel (0) target = $region45
  $region44: #{tpu_custom_call.1} parent=0 // pred_region
    _
  $region45: #{tpu_custom_call.1} parent=0 // pred_fallthru
    _
  // Predicated region
  $region46: #{tpu_custom_call.1} parent=0 // pred_check
    _
  $region47: #{tpu_custom_call.1} parent=0 // pred_check_branch
    %43 = sbr.rel (0) target = $region49
  $region48: #{tpu_custom_call.1} parent=0 // pred_region
    _
  $region49: #{tpu_custom_call.1} parent=0 // pred_fallthru
    _
  // Predicated region
  $region50: #{tpu_custom_call.1} parent=0 // pred_check
    _
  $region51: #{tpu_custom_call.1} parent=0 // pred_check_branch
    %45 = sbr.rel (0) target = $region53
  $region52: #{tpu_custom_call.1} parent=0 // pred_region
    _
  $region53: #{tpu_custom_call.1} parent=0 // pred_fallthru
    _
  // Predicated region
  $region54: #{tpu_custom_call.1} parent=0 // pred_check
    _
  $region55: #{tpu_custom_call.1} parent=0 // pred_check_branch
    %47 = sbr.rel (0) target = $region57
  $region56: #{tpu_custom_call.1} parent=0 // pred_region
    _
  $region57: #{tpu_custom_call.1} parent=0 // pred_fallthru
    _
  // Predicated region
  $region58: #{tpu_custom_call.1} parent=0 // pred_check
    _
  $region59: #{tpu_custom_call.1} parent=0 // pred_check_branch
    %49 = sbr.rel (0) target = $region61
  $region60: #{tpu_custom_call.1} parent=0 // pred_region
    _
  $region61: #{tpu_custom_call.1} parent=0 // pred_fallthru
    _
  %v51 = vld [vmem:[%s0] sm:$0xff]
  %v52 = vld [vmem:[%s0 + $0x8] sm:$0xff]
  %v53 = vld [vmem:[%s2] sm:$0xff]
  %v54 = vld [vmem:[%s2 + $0x8] sm:$0xff]
  %v55 = vld [vmem:[%s2 + $0x10] sm:$0xff]
  %v56 = vld [vmem:[%s2 + $0x18] sm:$0xff]
  %v57 = vld [vmem:[%s2 + $0x20] sm:$0xff]
  %v58 = vld [vmem:[%s2 + $0x28] sm:$0xff]
  %v59 = vld [vmem:[%s2 + $0x30] sm:$0xff]
  %v60 = vld [vmem:[%s2 + $0x38] sm:$0xff]
  %v61 = vld [vmem:[%s2 + $0x40] sm:$0xff]
  %v62 = vld [vmem:[%s2 + $0x48] sm:$0xff]
  %v63 = vld [vmem:[%s2 + $0x50] sm:$0xff]
  %v64 = vld [vmem:[%s2 + $0x58] sm:$0xff]
  %v65 = vld [vmem:[%s2 + $0x60] sm:$0xff]
  %v66 = vld [vmem:[%s2 + $0x68] sm:$0xff]
  %v67 = vld [vmem:[%s2 + $0x70] sm:$0xff]
  %v68 = vld [vmem:[%s2 + $0x78] sm:$0xff]
  %v69 = vld [vmem:[%s2 + $0x80] sm:$0xff]
  %v70 = vld [vmem:[%s2 + $0x88] sm:$0xff]
  %v71 = vld [vmem:[%s2 + $0x90] sm:$0xff]
  %v72 = vld [vmem:[%s2 + $0x98] sm:$0xff]
  %v73 = vld [vmem:[%s2 + $0xa0] sm:$0xff]
  %v74 = vld [vmem:[%s2 + $0xa8] sm:$0xff]
  %v75 = vld [vmem:[%s2 + $0xb0] sm:$0xff]
  %v76 = vld [vmem:[%s2 + $0xb8] sm:$0xff]
  %v77 = vld [vmem:[%s2 + $0xc0] sm:$0xff]
  %v78 = vld [vmem:[%s2 + $0xc8] sm:$0xff]
  %v79 = vld [vmem:[%s2 + $0xd0] sm:$0xff]
  %v80 = vld [vmem:[%s3] sm:$0x3]
  %v82 = vlaneseq
  %v83 = vshrl.u32 %v82, 7
  %v84 = vsub.s32 0, %v83
  %v85 = vrot.slane %v80, %v84
  %v86 = vlaneseq
  %v87 = vshrl.u32 %v86, 7
  %v88 = vsub.s32 1, %v87
  %v89 = vrot.slane %v80, %v88
  %v94 = vunpack.c.l.b16 %v51
  %v95 = vunpack.c.h.b16 %v51
  %v96 = vunpack.c.l.b16 %v52
  %v97 = vunpack.c.h.b16 %v52
  %v98 = vpack.c.b16 %v96, %v94
  %v99 = vpack.c.b16 %v97, %v95
  %v128 = vunpack.c.l.b16 %v53
  %v129 = vunpack.c.h.b16 %v53
  %v130 = vunpack.c.l.b16 %v54
  %v131 = vunpack.c.h.b16 %v54
  %v132 = vunpack.c.l.b16 %v55
  %v133 = vunpack.c.h.b16 %v55
  %v134 = vunpack.c.l.b16 %v56
  %v135 = vunpack.c.h.b16 %v56
  %v136 = vunpack.c.l.b16 %v57
  %v137 = vunpack.c.h.b16 %v57
  %v138 = vunpack.c.l.b16 %v58
  %v139 = vunpack.c.h.b16 %v58
  %v140 = vunpack.c.l.b16 %v59
  %v141 = vunpack.c.h.b16 %v59
  %v142 = vunpack.c.l.b16 %v60
  %v143 = vunpack.c.h.b16 %v60
  %v144 = vunpack.c.l.b16 %v61
  %v145 = vunpack.c.h.b16 %v61
  %v146 = vunpack.c.l.b16 %v62
  %v147 = vunpack.c.h.b16 %v62
  %v148 = vunpack.c.l.b16 %v63
  %v149 = vunpack.c.h.b16 %v63
  %v150 = vunpack.c.l.b16 %v64
  %v151 = vunpack.c.h.b16 %v64
  %v152 = vunpack.c.l.b16 %v65
  %v153 = vunpack.c.h.b16 %v65
  %v154 = vunpack.c.l.b16 %v66
  %v155 = vunpack.c.h.b16 %v66
  %v156 = vunpack.c.l.b16 %v67
  %v157 = vunpack.c.h.b16 %v67
  %v158 = vunpack.c.l.b16 %v68
  %v159 = vunpack.c.h.b16 %v68
  %v160 = vunpack.c.l.b16 %v69
  %v161 = vunpack.c.h.b16 %v69
  %v162 = vunpack.c.l.b16 %v70
  %v163 = vunpack.c.h.b16 %v70
  %v164 = vunpack.c.l.b16 %v71
  %v165 = vunpack.c.h.b16 %v71
  %v166 = vunpack.c.l.b16 %v72
  %v167 = vunpack.c.h.b16 %v72
  %v168 = vunpack.c.l.b16 %v73
  %v169 = vunpack.c.h.b16 %v73
  %v170 = vunpack.c.l.b16 %v74
  %v171 = vunpack.c.h.b16 %v74
  %v172 = vunpack.c.l.b16 %v75
  %v173 = vunpack.c.h.b16 %v75
  %v174 = vunpack.c.l.b16 %v76
  %v175 = vunpack.c.h.b16 %v76
  %v176 = vunpack.c.l.b16 %v77
  %v177 = vunpack.c.h.b16 %v77
  %v178 = vunpack.c.l.b16 %v78
  %v179 = vunpack.c.h.b16 %v78
  %v180 = vunpack.c.l.b16 %v79
  %v181 = vunpack.c.h.b16 %v79
  %v182 = vpack.c.b16 %v130, %v128
  %v183 = vpack.c.b16 %v131, %v129
  %v184 = vpack.c.b16 %v134, %v132
  %v185 = vpack.c.b16 %v135, %v133
  %v186 = vpack.c.b16 %v138, %v136
  %v187 = vpack.c.b16 %v139, %v137
  %v188 = vpack.c.b16 %v142, %v140
  %v189 = vpack.c.b16 %v143, %v141
  %v190 = vpack.c.b16 %v146, %v144
  %v191 = vpack.c.b16 %v147, %v145
  %v192 = vpack.c.b16 %v150, %v148
  %v193 = vpack.c.b16 %v151, %v149
  %v194 = vpack.c.b16 %v154, %v152
  %v195 = vpack.c.b16 %v155, %v153
  %v196 = vpack.c.b16 %v158, %v156
  %v197 = vpack.c.b16 %v159, %v157
  %v198 = vpack.c.b16 %v162, %v160
  %v199 = vpack.c.b16 %v163, %v161
  %v200 = vpack.c.b16 %v166, %v164
  %v201 = vpack.c.b16 %v167, %v165
  %v202 = vpack.c.b16 %v170, %v168
  %v203 = vpack.c.b16 %v171, %v169
  %v204 = vpack.c.b16 %v174, %v172
  %v205 = vpack.c.b16 %v175, %v173
  %v206 = vpack.c.b16 %v178, %v176
  %v207 = vpack.c.b16 %v179, %v177
  %v208 = vpack.c.b16 %v180, %v180
  %v209 = vpack.c.b16 %v181, %v181
  %vm236 = vcmask 719872
  %v238 = vsel %vm236, %v99, 0
  %vm240 = vcmask 1043456
  %v242 = vsel %vm240, %v208, 0
  %v245 = vsel %vm240, %v209, 0
  %247 = vmatprep.subr.bf16.mxu0 %v183
  %248 = vmatpush1.bf16.msra.mxu0 %v182
  %249 = vmatprep.subr.bf16.mxu0 %v185
  %250 = vmatpush1.bf16.msra.mxu0 %v184
  %251 = vmatprep.subr.bf16.mxu0 %v187
  %252 = vmatpush1.bf16.msra.mxu0 %v186
  %253 = vmatprep.subr.bf16.mxu0 %v189
  %254 = vmatpush1.bf16.msra.mxu0 %v188
  %255 = vmatprep.subr.bf16.mxu0 %v191
  %256 = vmatpush1.bf16.msra.mxu0 %v190
  %257 = vmatprep.subr.bf16.mxu0 %v193
  %258 = vmatpush1.bf16.msra.mxu0 %v192
  %259 = vmatprep.subr.bf16.mxu0 %v195
  %260 = vmatpush1.bf16.msra.mxu0 %v194
  %261 = vmatprep.subr.bf16.mxu0 %v197
  %262 = vmatpush1.bf16.msra.mxu0 %v196
  %263 = vmatprep.subr.bf16.mxu0 %v199
  %264 = vmatpush1.bf16.msra.mxu0 %v198
  %265 = vmatprep.subr.bf16.mxu0 %v201
  %266 = vmatpush1.bf16.msra.mxu0 %v200
  %267 = vmatprep.subr.bf16.mxu0 %v203
  %268 = vmatpush1.bf16.msra.mxu0 %v202
  %269 = vmatprep.subr.bf16.mxu0 %v205
  %270 = vmatpush1.bf16.msra.mxu0 %v204
  %271 = vmatprep.subr.bf16.mxu0 %v207
  %272 = vmatpush1.bf16.msra.mxu0 %v206
  %273 = vmatprep.subr.bf16.mxu0 %v245
  %274 = vmatpush1.bf16.msra.mxu0 %v242
  %275 = vmatprep.subr.bf16.mxu0 0
  %276 = vmatpush1.bf16.msra.mxu0 0
  %277 = vmatprep.subr.bf16.mxu0 0
  %278 = vmatpush1.bf16.msra.mxu0 0
  %279 = vmatprep.mubr.bf16.mxu0 %v238
  %280 = vmatmul.mubr.bf16.gmra.mrb[0].mxu0 %v98
  %v281 = vpop.f32.mrb[0].mxu0
  %v282 = vadd.f32 %v85, %v281
  %v283 = vpop.f32.mrb[0].mxu0
  %v284 = vadd.f32 %v89, %v283
  %v285 = vpop.f32.mrb[0].mxu0
  %v286 = vadd.f32 %v85, %v285
  %v287 = vpop.f32.mrb[0].mxu0
  %v288 = vadd.f32 %v89, %v287
  %289 = vdwg.mxu0
  %v290 = vtanh.pop %v282
  %v291 = vtanh.pop %v284
  %v292 = vtanh.pop %v286
  %v293 = vtanh.pop %v288
  %v294 = vpack.c.bf16 %v292, %v290
  %v295 = vpack.c.bf16 %v293, %v291
  %v296 = vld [vmem:[%s4] sm:$0xff]
  %v297 = vld [vmem:[%s4 + $0x8] sm:$0xff]
  %v298 = vld [vmem:[%s4 + $0x10] sm:$0xff]
  %v299 = vld [vmem:[%s4 + $0x18] sm:$0xff]
  %v300 = vld [vmem:[%s4 + $0x20] sm:$0xff]
  %v301 = vld [vmem:[%s4 + $0x28] sm:$0xff]
  %v302 = vld [vmem:[%s4 + $0x30] sm:$0xff]
  %v303 = vld [vmem:[%s4 + $0x38] sm:$0xff]
  %v304 = vld [vmem:[%s4 + $0x40] sm:$0xff]
  %v305 = vld [vmem:[%s4 + $0x48] sm:$0xff]
  %v306 = vld [vmem:[%s4 + $0x50] sm:$0xff]
  %v307 = vld [vmem:[%s4 + $0x58] sm:$0xff]
  %v308 = vld [vmem:[%s4 + $0x60] sm:$0xff]
  %v309 = vld [vmem:[%s4 + $0x68] sm:$0xff]
  %v310 = vld [vmem:[%s4 + $0x70] sm:$0xff]
  %v311 = vld [vmem:[%s4 + $0x78] sm:$0xff]
  %v312 = vld [vmem:[%s4 + $0x80] sm:$0xff]
  %v313 = vld [vmem:[%s4 + $0x88] sm:$0xff]
  %v314 = vld [vmem:[%s4 + $0x90] sm:$0xff]
  %v315 = vld [vmem:[%s4 + $0x98] sm:$0xff]
  %v316 = vld [vmem:[%s4 + $0xa0] sm:$0xff]
  %v317 = vld [vmem:[%s4 + $0xa8] sm:$0xff]
  %v318 = vld [vmem:[%s4 + $0xb0] sm:$0xff]
  %v319 = vld [vmem:[%s4 + $0xb8] sm:$0xff]
  %v320 = vld [vmem:[%s4 + $0xc0] sm:$0xff]
  %v321 = vld [vmem:[%s4 + $0xc8] sm:$0xff]
  %v322 = vld [vmem:[%s5] sm:$0x3]
  %v324 = vlaneseq
  %v325 = vshrl.u32 %v324, 7
  %v326 = vsub.s32 0, %v325
  %v327 = vrot.slane %v322, %v326
  %v328 = vlaneseq
  %v329 = vshrl.u32 %v328, 7
  %v330 = vsub.s32 1, %v329
  %v331 = vrot.slane %v322, %v330
  %v360 = vunpack.c.l.b16 %v296
  %v361 = vunpack.c.h.b16 %v296
  %v362 = vunpack.c.l.b16 %v297
  %v363 = vunpack.c.h.b16 %v297
  %v364 = vunpack.c.l.b16 %v298
  %v365 = vunpack.c.h.b16 %v298
  %v366 = vunpack.c.l.b16 %v299
  %v367 = vunpack.c.h.b16 %v299
  %v368 = vunpack.c.l.b16 %v300
  %v369 = vunpack.c.h.b16 %v300
  %v370 = vunpack.c.l.b16 %v301
  %v371 = vunpack.c.h.b16 %v301
  %v372 = vunpack.c.l.b16 %v302
  %v373 = vunpack.c.h.b16 %v302
  %v374 = vunpack.c.l.b16 %v303
  %v375 = vunpack.c.h.b16 %v303
  %v376 = vunpack.c.l.b16 %v304
  %v377 = vunpack.c.h.b16 %v304
  %v378 = vunpack.c.l.b16 %v305
  %v379 = vunpack.c.h.b16 %v305
  %v380 = vunpack.c.l.b16 %v306
  %v381 = vunpack.c.h.b16 %v306
  %v382 = vunpack.c.l.b16 %v307
  %v383 = vunpack.c.h.b16 %v307
  %v384 = vunpack.c.l.b16 %v308
  %v385 = vunpack.c.h.b16 %v308
  %v386 = vunpack.c.l.b16 %v309
  %v387 = vunpack.c.h.b16 %v309
  %v388 = vunpack.c.l.b16 %v310
  %v389 = vunpack.c.h.b16 %v310
  %v390 = vunpack.c.l.b16 %v311
  %v391 = vunpack.c.h.b16 %v311
  %v392 = vunpack.c.l.b16 %v312
  %v393 = vunpack.c.h.b16 %v312
  %v394 = vunpack.c.l.b16 %v313
  %v395 = vunpack.c.h.b16 %v313
  %v396 = vunpack.c.l.b16 %v314
  %v397 = vunpack.c.h.b16 %v314
  %v398 = vunpack.c.l.b16 %v315
  %v399 = vunpack.c.h.b16 %v315
  %v400 = vunpack.c.l.b16 %v316
  %v401 = vunpack.c.h.b16 %v316
  %v402 = vunpack.c.l.b16 %v317
  %v403 = vunpack.c.h.b16 %v317
  %v404 = vunpack.c.l.b16 %v318
  %v405 = vunpack.c.h.b16 %v318
  %v406 = vunpack.c.l.b16 %v319
  %v407 = vunpack.c.h.b16 %v319
  %v408 = vunpack.c.l.b16 %v320
  %v409 = vunpack.c.h.b16 %v320
  %v410 = vunpack.c.l.b16 %v321
  %v411 = vunpack.c.h.b16 %v321
  %v412 = vpack.c.b16 %v362, %v360
  %v413 = vpack.c.b16 %v363, %v361
  %v414 = vpack.c.b16 %v366, %v364
  %v415 = vpack.c.b16 %v367, %v365
  %v416 = vpack.c.b16 %v370, %v368
  %v417 = vpack.c.b16 %v371, %v369
  %v418 = vpack.c.b16 %v374, %v372
  %v419 = vpack.c.b16 %v375, %v373
  %v420 = vpack.c.b16 %v378, %v376
  %v421 = vpack.c.b16 %v379, %v377
  %v422 = vpack.c.b16 %v382, %v380
  %v423 = vpack.c.b16 %v383, %v381
  %v424 = vpack.c.b16 %v386, %v384
  %v425 = vpack.c.b16 %v387, %v385
  %v426 = vpack.c.b16 %v390, %v388
  %v427 = vpack.c.b16 %v391, %v389
  %v428 = vpack.c.b16 %v394, %v392
  %v429 = vpack.c.b16 %v395, %v393
  %v430 = vpack.c.b16 %v398, %v396
  %v431 = vpack.c.b16 %v399, %v397
  %v432 = vpack.c.b16 %v402, %v400
  %v433 = vpack.c.b16 %v403, %v401
  %v434 = vpack.c.b16 %v406, %v404
  %v435 = vpack.c.b16 %v407, %v405
  %v436 = vpack.c.b16 %v410, %v408
  %v437 = vpack.c.b16 %v411, %v409
  %vm464 = vcmask 654336
  %v466 = vsel %vm464, %v295, 0
  %468 = vmatprep.subr.bf16.mxu0 %v413
  %469 = vmatpush1.bf16.msra.mxu0 %v412
  %470 = vmatprep.subr.bf16.mxu0 %v415
  %471 = vmatpush1.bf16.msra.mxu0 %v414
  %472 = vmatprep.subr.bf16.mxu0 %v417
  %473 = vmatpush1.bf16.msra.mxu0 %v416
  %474 = vmatprep.subr.bf16.mxu0 %v419
  %475 = vmatpush1.bf16.msra.mxu0 %v418
  %476 = vmatprep.subr.bf16.mxu0 %v421
  %477 = vmatpush1.bf16.msra.mxu0 %v420
  %478 = vmatprep.subr.bf16.mxu0 %v423
  %479 = vmatpush1.bf16.msra.mxu0 %v422
  %480 = vmatprep.subr.bf16.mxu0 %v425
  %481 = vmatpush1.bf16.msra.mxu0 %v424
  %482 = vmatprep.subr.bf16.mxu0 %v427
  %483 = vmatpush1.bf16.msra.mxu0 %v426
  %484 = vmatprep.subr.bf16.mxu0 %v429
  %485 = vmatpush1.bf16.msra.mxu0 %v428
  %486 = vmatprep.subr.bf16.mxu0 %v431
  %487 = vmatpush1.bf16.msra.mxu0 %v430
  %488 = vmatprep.subr.bf16.mxu0 %v433
  %489 = vmatpush1.bf16.msra.mxu0 %v432
  %490 = vmatprep.subr.bf16.mxu0 %v435
  %491 = vmatpush1.bf16.msra.mxu0 %v434
  %492 = vmatprep.subr.bf16.mxu0 %v437
  %493 = vmatpush1.bf16.msra.mxu0 %v436
  %494 = vmatprep.subr.bf16.mxu0 0
  %495 = vmatpush1.bf16.msra.mxu0 0
  %496 = vmatprep.subr.bf16.mxu0 0
  %497 = vmatpush1.bf16.msra.mxu0 0
  %498 = vmatprep.subr.bf16.mxu0 0
  %499 = vmatpush1.bf16.msra.mxu0 0
  %500 = vmatprep.mubr.bf16.mxu0 %v466
  %501 = vmatmul.mubr.bf16.gmra.mrb[0].mxu0 %v294
  %v502 = vpop.f32.mrb[0].mxu0
  %v503 = vadd.f32 %v327, %v502
  %v504 = vpop.f32.mrb[0].mxu0
  %v505 = vadd.f32 %v331, %v504
  %v506 = vpop.f32.mrb[0].mxu0
  %v507 = vadd.f32 %v327, %v506
  %v508 = vpop.f32.mrb[0].mxu0
  %v509 = vadd.f32 %v331, %v508
  %510 = vdwg.mxu0
  %v511 = vtanh.pop %v503
  %v512 = vtanh.pop %v505
  %v513 = vtanh.pop %v507
  %v514 = vtanh.pop %v509
  %v515 = vpack.c.bf16 %v513, %v511
  %v516 = vpack.c.bf16 %v514, %v512
  %v517 = vld [vmem:[%s6] sm:$0xf]
  %v518 = vld [vmem:[%s6 + $0x4] sm:$0xf]
  %v519 = vld [vmem:[%s6 + $0x8] sm:$0xf]
  %v520 = vld [vmem:[%s6 + $0xc] sm:$0xf]
  %v521 = vld [vmem:[%s6 + $0x10] sm:$0xf]
  %v522 = vld [vmem:[%s6 + $0x14] sm:$0xf]
  %v523 = vld [vmem:[%s6 + $0x18] sm:$0xf]
  %v524 = vld [vmem:[%s6 + $0x1c] sm:$0xf]
  %v525 = vld [vmem:[%s6 + $0x20] sm:$0xf]
  %v526 = vld [vmem:[%s6 + $0x24] sm:$0xf]
  %v527 = vld [vmem:[%s6 + $0x28] sm:$0xf]
  %v528 = vld [vmem:[%s6 + $0x2c] sm:$0xf]
  %v529 = vld [vmem:[%s6 + $0x30] sm:$0xf]
  %v530 = vld [vmem:[%s6 + $0x34] sm:$0xf]
  %v531 = vld [vmem:[%s6 + $0x38] sm:$0xf]
  %v532 = vld [vmem:[%s6 + $0x3c] sm:$0xf]
  %v533 = vld [vmem:[%s6 + $0x40] sm:$0xf]
  %v534 = vld [vmem:[%s6 + $0x44] sm:$0xf]
  %v535 = vld [vmem:[%s6 + $0x48] sm:$0xf]
  %v536 = vld [vmem:[%s6 + $0x4c] sm:$0xf]
  %v537 = vld [vmem:[%s6 + $0x50] sm:$0xf]
  %v538 = vld [vmem:[%s6 + $0x54] sm:$0xf]
  %v539 = vld [vmem:[%s7] sm:$0x1]
  %v541 = vlaneseq
  %v542 = vshrl.u32 %v541, 7
  %v543 = vsub.s32 0, %v542
  %v544 = vrot.slane %v539, %v543
  %v568 = vunpack.c.l.b16 %v517
  %v569 = vunpack.c.l.b16 %v518
  %v570 = vunpack.c.l.b16 %v519
  %v571 = vunpack.c.l.b16 %v520
  %v572 = vunpack.c.l.b16 %v521
  %v573 = vunpack.c.l.b16 %v522
  %v574 = vunpack.c.l.b16 %v523
  %v575 = vunpack.c.l.b16 %v524
  %v576 = vunpack.c.l.b16 %v525
  %v577 = vunpack.c.l.b16 %v526
  %v578 = vunpack.c.l.b16 %v527
  %v579 = vunpack.c.l.b16 %v528
  %v580 = vunpack.c.l.b16 %v529
  %v581 = vunpack.c.l.b16 %v530
  %v582 = vunpack.c.l.b16 %v531
  %v583 = vunpack.c.l.b16 %v532
  %v584 = vunpack.c.l.b16 %v533
  %v585 = vunpack.c.l.b16 %v534
  %v586 = vunpack.c.l.b16 %v535
  %v587 = vunpack.c.l.b16 %v536
  %v588 = vunpack.c.l.b16 %v537
  %v589 = vunpack.c.l.b16 %v538
  %v590 = vpack.c.b16 %v569, %v568
  %v591 = vpack.c.b16 %v571, %v570
  %v592 = vpack.c.b16 %v573, %v572
  %v593 = vpack.c.b16 %v575, %v574
  %v594 = vpack.c.b16 %v577, %v576
  %v595 = vpack.c.b16 %v579, %v578
  %v596 = vpack.c.b16 %v581, %v580
  %v597 = vpack.c.b16 %v583, %v582
  %v598 = vpack.c.b16 %v585, %v584
  %v599 = vpack.c.b16 %v587, %v586
  %v600 = vpack.c.b16 %v589, %v588
  %vm612 = vcmask 392192
  %v614 = vsel %vm612, %v516, 0
  %616 = vmatprep.subr.bf16.mxu0 0
  %617 = vmatpush1.bf16.msra.mxu0 %v590
  %618 = vmatprep.subr.bf16.mxu0 0
  %619 = vmatpush1.bf16.msra.mxu0 %v591
  %620 = vmatprep.subr.bf16.mxu0 0
  %621 = vmatpush1.bf16.msra.mxu0 %v592
  %622 = vmatprep.subr.bf16.mxu0 0
  %623 = vmatpush1.bf16.msra.mxu0 %v593
  %624 = vmatprep.subr.bf16.mxu0 0
  %625 = vmatpush1.bf16.msra.mxu0 %v594
  %626 = vmatprep.subr.bf16.mxu0 0
  %627 = vmatpush1.bf16.msra.mxu0 %v595
  %628 = vmatprep.subr.bf16.mxu0 0
  %629 = vmatpush1.bf16.msra.mxu0 %v596
  %630 = vmatprep.subr.bf16.mxu0 0
  %631 = vmatpush1.bf16.msra.mxu0 %v597
  %632 = vmatprep.subr.bf16.mxu0 0
  %633 = vmatpush1.bf16.msra.mxu0 %v598
  %634 = vmatprep.subr.bf16.mxu0 0
  %635 = vmatpush1.bf16.msra.mxu0 %v599
  %636 = vmatprep.subr.bf16.mxu0 0
  %637 = vmatpush1.bf16.msra.mxu0 %v600
  %638 = vmatprep.subr.bf16.mxu0 0
  %639 = vmatpush1.bf16.msra.mxu0 0
  %640 = vmatprep.subr.bf16.mxu0 0
  %641 = vmatpush1.bf16.msra.mxu0 0
  %642 = vmatprep.subr.bf16.mxu0 0
  %643 = vmatpush1.bf16.msra.mxu0 0
  %644 = vmatprep.subr.bf16.mxu0 0
  %645 = vmatpush1.bf16.msra.mxu0 0
  %646 = vmatprep.subr.bf16.mxu0 0
  %647 = vmatpush1.bf16.msra.mxu0 0
  %648 = vmatprep.mubr.bf16.mxu0 %v614
  %649 = vmatmul.mubr.bf16.gmra.mrb[0].mxu0 %v515
  %v650 = vpop.f32.mrb[0].mxu0
  %v651 = vadd.f32 %v544, %v650
  %v652 = vpop.f32.mrb[0].mxu0
  %v653 = vpop.f32.mrb[0].mxu0
  %v654 = vadd.f32 %v544, %v653
  %v655 = vpop.f32.mrb[0].mxu0
  %656 = vdwg.mxu0
  %v657 = vtanh.pop %v651
  %v658 = vtanh.pop %v654
  %v659 = vpack.c.bf16 %v658, %v657
  %v660 = vld [vmem:[%s8] sm:$0xf]
  %v661 = vld [vmem:[%s8 + $0x4] sm:$0xf]
  %v662 = vld [vmem:[%s8 + $0x8] sm:$0xf]
  %v663 = vld [vmem:[%s8 + $0xc] sm:$0xf]
  %v664 = vld [vmem:[%s8 + $0x10] sm:$0xf]
  %v665 = vld [vmem:[%s8 + $0x14] sm:$0xf]
  %v666 = vld [vmem:[%s8 + $0x18] sm:$0xf]
  %v667 = vld [vmem:[%s8 + $0x1c] sm:$0xf]
  %v668 = vld [vmem:[%s9] sm:$0x1]
  %v670 = vlaneseq
  %v671 = vshrl.u32 %v670, 7
  %v672 = vsub.s32 0, %v671
  %v673 = vrot.slane %v668, %v672
  %v683 = vunpack.c.l.b16 %v660
  %v684 = vunpack.c.l.b16 %v661
  %v685 = vunpack.c.l.b16 %v662
  %v686 = vunpack.c.l.b16 %v663
  %v687 = vunpack.c.l.b16 %v664
  %v688 = vunpack.c.l.b16 %v665
  %v689 = vunpack.c.l.b16 %v666
  %v690 = vunpack.c.l.b16 %v667
  %v691 = vpack.c.b16 %v684, %v683
  %v692 = vpack.c.b16 %v686, %v685
  %v693 = vpack.c.b16 %v688, %v687
  %v694 = vpack.c.b16 %v690, %v689
  %vm699 = vcmask 523264
  %v701 = vsel %vm699, %v659, 0
  %703 = vmatprep.subr.bf16.mxu0 0
  %704 = vmatpush1.bf16.msra.mxu0 %v691
  %705 = vmatprep.subr.bf16.mxu0 0
  %706 = vmatpush1.bf16.msra.mxu0 %v692
  %707 = vmatprep.subr.bf16.mxu0 0
  %708 = vmatpush1.bf16.msra.mxu0 %v693
  %709 = vmatprep.subr.bf16.mxu0 0
  %710 = vmatpush1.bf16.msra.mxu0 %v694
  %711 = vmatprep.subr.bf16.mxu0 0
  %712 = vmatpush1.bf16.msra.mxu0 0
  %713 = vmatprep.subr.bf16.mxu0 0
  %714 = vmatpush1.bf16.msra.mxu0 0
  %715 = vmatprep.subr.bf16.mxu0 0
  %716 = vmatpush1.bf16.msra.mxu0 0
  %717 = vmatprep.subr.bf16.mxu0 0
  %718 = vmatpush1.bf16.msra.mxu0 0
  %719 = vmatprep.subr.bf16.mxu0 0
  %720 = vmatpush1.bf16.msra.mxu0 0
  %721 = vmatprep.subr.bf16.mxu0 0
  %722 = vmatpush1.bf16.msra.mxu0 0
  %723 = vmatprep.subr.bf16.mxu0 0
  %724 = vmatpush1.bf16.msra.mxu0 0
  %725 = vmatprep.subr.bf16.mxu0 0
  %726 = vmatpush1.bf16.msra.mxu0 0
  %727 = vmatprep.subr.bf16.mxu0 0
  %728 = vmatpush1.bf16.msra.mxu0 0
  %729 = vmatprep.subr.bf16.mxu0 0
  %730 = vmatpush1.bf16.msra.mxu0 0
  %731 = vmatprep.subr.bf16.mxu0 0
  %732 = vmatpush1.bf16.msra.mxu0 0
  %733 = vmatprep.subr.bf16.mxu0 0
  %734 = vmatpush1.bf16.msra.mxu0 0
  %735 = vmatprep.mubr.bf16.mxu0 0
  %736 = vmatmul.mubr.bf16.gmra.mrb[0].mxu0 %v701
  %v737 = vpop.f32.mrb[0].mxu0
  %v738 = vadd.f32 %v673, %v737
  %v739 = vpop.f32.mrb[0].mxu0
  %v740 = vpop.f32.mrb[0].mxu0
  %v741 = vadd.f32 %v673, %v740
  %v742 = vpop.f32.mrb[0].mxu0
  %743 = vdwg.mxu0
  %v744 = vtanh.pop %v738
  %v745 = vtanh.pop %v741
  %v746 = vld [vmem:[%s1] sm:$0xf]
  %v747 = vld [vmem:[%s1 + $0x4] sm:$0xf]
  %v748 = vld [vmem:[%s10] sm:$0x3]
  %v749 = vld [vmem:[%s11] sm:$0x1]
  %v751 = vlaneseq
  %v752 = vshrl.u32 %v751, 7
  %v753 = vsub.s32 0, %v752
  %v754 = vrot.slane %v749, %v753
  %v758 = vunpack.c.l.b16 %v746
  %v759 = vunpack.c.l.b16 %v747
  %v760 = vpack.c.b16 %v759, %v758
  %vm761 = vcmask 23552
  %v763 = vsel %vm761, %v760, 0
  %vm765 = vcmask 1040384
  %vm766 = vcmask 1041408
  %v767 = vsel %vm765, 4294967295, 65535
  %v768 = vsel %vm766, %v767, 0
  %v770 = vand.u32 %v748, %v768
  %772 = vmatprep.subr.bf16.mxu0 0
  %773 = vmatpush1.bf16.msra.mxu0 %v770
  %774 = vmatprep.subr.bf16.mxu0 0
  %775 = vmatpush1.bf16.msra.mxu0 0
  %776 = vmatprep.subr.bf16.mxu0 0
  %777 = vmatpush1.bf16.msra.mxu0 0
  %778 = vmatprep.subr.bf16.mxu0 0
  %779 = vmatpush1.bf16.msra.mxu0 0
  %780 = vmatprep.subr.bf16.mxu0 0
  %781 = vmatpush1.bf16.msra.mxu0 0
  %782 = vmatprep.subr.bf16.mxu0 0
  %783 = vmatpush1.bf16.msra.mxu0 0
  %784 = vmatprep.subr.bf16.mxu0 0
  %785 = vmatpush1.bf16.msra.mxu0 0
  %786 = vmatprep.subr.bf16.mxu0 0
  %787 = vmatpush1.bf16.msra.mxu0 0
  %788 = vmatprep.subr.bf16.mxu0 0
  %789 = vmatpush1.bf16.msra.mxu0 0
  %790 = vmatprep.subr.bf16.mxu0 0
  %791 = vmatpush1.bf16.msra.mxu0 0
  %792 = vmatprep.subr.bf16.mxu0 0
  %793 = vmatpush1.bf16.msra.mxu0 0
  %794 = vmatprep.subr.bf16.mxu0 0
  %795 = vmatpush1.bf16.msra.mxu0 0
  %796 = vmatprep.subr.bf16.mxu0 0
  %797 = vmatpush1.bf16.msra.mxu0 0
  %798 = vmatprep.subr.bf16.mxu0 0
  %799 = vmatpush1.bf16.msra.mxu0 0
  %800 = vmatprep.subr.bf16.mxu0 0
  %801 = vmatpush1.bf16.msra.mxu0 0
  %802 = vmatprep.subr.bf16.mxu0 0
  %803 = vmatpush1.bf16.msra.mxu0 0
  %804 = vmatprep.mubr.bf16.mxu0 0
  %805 = vmatmul.mubr.bf16.gmra.mrb[0].mxu0 %v763
  %v806 = vpop.f32.mrb[0].mxu0
  %v807 = vadd.f32 %v754, %v806
  %v808 = vpop.f32.mrb[0].mxu0
  %v809 = vpop.f32.mrb[0].mxu0
  %v810 = vadd.f32 %v754, %v809
  %v811 = vpop.f32.mrb[0].mxu0
  %812 = vdwg.mxu0
  %v813 = vtanh.pop %v807
  %v814 = vtanh.pop %v810
  %817 = vrot.lane.b32.xlu0 %v813, 16
  %v818 = vpop.permute.xlu0 %817
  %819 = vrot.lane.b32.xlu0 %v814, 16
  %v820 = vpop.permute.xlu0 %819
  %vm823 = vcmask 130048
  %v824 = vsel %vm823, %v744, %v818
  %v825 = vsel %vm823, %v745, %v820
  %v826 = vpack.c.bf16 %v825, %v824
  %v827 = vld [vmem:[%s12] sm:$0xf]
  %v828 = vld [vmem:[%s12 + $0x4] sm:$0xf]
  %v829 = vld [vmem:[%s12 + $0x8] sm:$0xf]
  %v830 = vld [vmem:[%s12 + $0xc] sm:$0xf]
  %v831 = vld [vmem:[%s13] sm:$0x1]
  %v833 = vlaneseq
  %v834 = vshrl.u32 %v833, 7
  %v835 = vsub.s32 0, %v834
  %v836 = vrot.slane %v831, %v835
  %v842 = vunpack.c.l.b16 %v827
  %v843 = vunpack.c.l.b16 %v828
  %v844 = vunpack.c.l.b16 %v829
  %v845 = vunpack.c.l.b16 %v830
  %v846 = vpack.c.b16 %v843, %v842
  %v847 = vpack.c.b16 %v845, %v844
  %vm850 = vcmask 261120
  %v852 = vsel %vm850, %v826, 0
  %854 = vmatprep.subr.bf16.mxu0 0
  %855 = vmatpush1.bf16.msra.mxu0 %v846
  %856 = vmatprep.subr.bf16.mxu0 0
  %857 = vmatpush1.bf16.msra.mxu0 %v847
  %858 = vmatprep.subr.bf16.mxu0 0
  %859 = vmatpush1.bf16.msra.mxu0 0
  %860 = vmatprep.subr.bf16.mxu0 0
  %861 = vmatpush1.bf16.msra.mxu0 0
  %862 = vmatprep.subr.bf16.mxu0 0
  %863 = vmatpush1.bf16.msra.mxu0 0
  %864 = vmatprep.subr.bf16.mxu0 0
  %865 = vmatpush1.bf16.msra.mxu0 0
  %866 = vmatprep.subr.bf16.mxu0 0
  %867 = vmatpush1.bf16.msra.mxu0 0
  %868 = vmatprep.subr.bf16.mxu0 0
  %869 = vmatpush1.bf16.msra.mxu0 0
  %870 = vmatprep.subr.bf16.mxu0 0
  %871 = vmatpush1.bf16.msra.mxu0 0
  %872 = vmatprep.subr.bf16.mxu0 0
  %873 = vmatpush1.bf16.msra.mxu0 0
  %874 = vmatprep.subr.bf16.mxu0 0
  %875 = vmatpush1.bf16.msra.mxu0 0
  %876 = vmatprep.subr.bf16.mxu0 0
  %877 = vmatpush1.bf16.msra.mxu0 0
  %878 = vmatprep.subr.bf16.mxu0 0
  %879 = vmatpush1.bf16.msra.mxu0 0
  %880 = vmatprep.subr.bf16.mxu0 0
  %881 = vmatpush1.bf16.msra.mxu0 0
  %882 = vmatprep.subr.bf16.mxu0 0
  %883 = vmatpush1.bf16.msra.mxu0 0
  %884 = vmatprep.subr.bf16.mxu0 0
  %885 = vmatpush1.bf16.msra.mxu0 0
  %886 = vmatprep.mubr.bf16.mxu0 0
  %887 = vmatmul.mubr.bf16.gmra.mrb[0].mxu0 %v852
  %v888 = vpop.f32.mrb[0].mxu0
  %v889 = vadd.f32 %v836, %v888
  %v890 = vpop.f32.mrb[0].mxu0
  %v891 = vpop.f32.mrb[0].mxu0
  %v892 = vadd.f32 %v836, %v891
  %v893 = vpop.f32.mrb[0].mxu0
  %894 = vdwg.mxu0
  %v895 = vtanh.pop %v889
  %v896 = vtanh.pop %v892
  %v897 = vld [vmem:[%s14] sm:$0x1]
  %v899 = vlaneseq
  %v900 = vshrl.u32 %v899, 7
  %v901 = vsub.s32 0, %v900
  %v902 = vrot.slane %v897, %v901
  %v904 = vmul.f32 %v895, %v902
  %v905 = vmul.f32 %v896, %v902
  %vm906 = vcmask 31744
  %v907 = vsel %vm906, %v904, 0.0
  %908 = vadd.xlane.f32.xlu0 %v907
  %v909 = vpop.xlane.xlu0 %908
  %v910 = vsel %vm906, %v905, 0.0
  %911 = vadd.xlane.f32.xlu0 %v910
  %v912 = vpop.xlane.xlu0 %911
  %vm913 = vcmask 7168
  %914 = vst.msk [vmem:[%s15] sm:$0xff] %vm913, %v909
  %915 = vst.msk [vmem:[%s15 + $0x8] sm:$0xff] %vm913, %v912
  // Predicated region
  $region62: #{tpu_custom_call.1} parent=0 // pred_check
    _
  $region63: #{tpu_custom_call.1} parent=0 // pred_check_branch
    %917 = sbr.rel (0) target = $region65
  $region64: #{tpu_custom_call.1} parent=0 // pred_region
    _
  $region65: #{tpu_custom_call.1} parent=0 // pred_fallthru
    _
  // Predicated region
  $region66: #{tpu_custom_call.1} parent=0 // pred_check
    _
  $region67: #{tpu_custom_call.1} parent=0 // pred_check_branch
    %919 = sbr.rel (0) target = $region69
  $region68: #{tpu_custom_call.1} parent=0 // pred_region
    _
  $region69: #{tpu_custom_call.1} parent=0 // pred_fallthru
    _

</llo_original>
